<compile_context>
chip_gen: v7x
topology: tpu7x:2x2x1
jax: 0.10.0
libtpu: 0.0.40
codegen_flags: <defaults>
</compile_context>

<pallas_src>
import jax
import jax.numpy as jnp
from jax.experimental import pallas as pl
from jax.experimental.pallas import tpu as pltpu

LN_EPS = 1e-5  # nn.LayerNorm default


def _round_up(x, m):
    return ((x + m - 1) // m) * m


def _patch_embed_ln_kernel(x_ref, w_ref, p_ref, o_ref):
    """Fused patch-projection matmul + bias + LayerNorm.

    x_ref: (TM, K)  patch-matrix tile (bf16 or f32; K = full contraction dim)
    w_ref: (K,  D)  projection weight (Conv2d weight reshaped)
    p_ref: (8,  D)  packed f32 params: row 0 = bias, row 1 = gamma, row 2 = beta
    o_ref: (TM, D)  f32 output tile
    """
    # MXU matmul with f32 accumulation regardless of streaming dtype.
    y = jnp.dot(x_ref[...], w_ref[...], preferred_element_type=jnp.float32)

    params = p_ref[...]
    bias = params[0:1, :]
    gamma = params[1:2, :]
    beta = params[2:3, :]

    y = y + bias
    mean = jnp.mean(y, axis=-1, keepdims=True)
    diff = y - mean
    var = jnp.mean(diff * diff, axis=-1, keepdims=True)
    y_norm = diff * jax.lax.rsqrt(var + LN_EPS)
    o_ref[...] = (y_norm * gamma + beta).astype(o_ref.dtype)


def patch_embed_layernorm(patches, w, b, gamma, beta, *, tile_m=4096):
    """patches: (M, K); w: (K, D); b/gamma/beta: (D,). Returns (M, D) f32."""
    M, K = patches.shape
    Kw, D = w.shape
    assert Kw == K

    # Pack bias / gamma / beta into one sublane-padded (8, D) f32 operand:
    # one resident DMA instead of three (1, D) masked loads.
    params = jnp.zeros((8, D), dtype=jnp.float32)
    params = (params.at[0].set(b.astype(jnp.float32))
                    .at[1].set(gamma.astype(jnp.float32))
                    .at[2].set(beta.astype(jnp.float32)))

    x_bytes = jnp.dtype(patches.dtype).itemsize
    w_bytes = jnp.dtype(w.dtype).itemsize

    # --- Row tile selection -------------------------------------------------
    # Start from tile_m (multiple of 8), never larger than M (rounded up).
    TM = min(_round_up(tile_m, 8), _round_up(M, 8))

    # At production M, keep >= 8 grid steps so each TensorCore still gets
    # enough iterations to software-pipeline after the megacore split (v7x).
    MIN_STEPS = 8
    if M >= MIN_STEPS * 512:
        TM = min(TM, _round_up(pl.cdiv(M, MIN_STEPS), 8))

    def tile_bytes(tm):
        return (2 * tm * K * x_bytes      # double-buffered streaming patches
                + 2 * tm * D * 4          # double-buffered streaming f32 output
                + 2 * K * D * w_bytes     # resident weight (worst-case 2 bufs)
                + 2 * 8 * D * 4)          # resident packed LN params

    # Clamp TM (not just the vmem limit) so a large tile_m degrades gracefully
    # and the footprint stays well inside v7x's 64 MiB-per-TC VMEM.
    VMEM_BUDGET = 24 << 20
    while TM > 8 and tile_bytes(TM) > VMEM_BUDGET:
        TM = max(8, _round_up(TM // 2, 8))

    grid_m = pl.cdiv(M, TM)

    # Never hand the compiler less scoped VMEM than the 32 MiB default
    # (room for the in-kernel f32 y / LN temporaries); cap at 48 MiB so it
    # always fits v7x's 64 MiB physical VMEM.
    vmem_limit = int(min(max(32 << 20, int(1.5 * tile_bytes(TM))), 48 << 20))

    return pl.pallas_call(
        _patch_embed_ln_kernel,
        out_shape=jax.ShapeDtypeStruct((M, D), jnp.float32),
        grid_spec=pltpu.PrefetchScalarGridSpec(
            num_scalar_prefetch=0,
            grid=(grid_m,),
            in_specs=[
                # Streaming patch rows: full-K block (== array extent, so no
                # HBM-side padding; one contiguous DMA per tile).
                pl.BlockSpec((TM, K), lambda i: (i, 0)),
                # Resident projection weight (constant block index).
                pl.BlockSpec((K, D), lambda i: (0, 0)),
                # Resident packed LN params.
                pl.BlockSpec((8, D), lambda i: (0, 0)),
            ],
            out_specs=pl.BlockSpec((TM, D), lambda i: (i, 0)),
        ),
        compiler_params=pltpu.CompilerParams(
            dimension_semantics=("parallel",),  # rows independent -> megacore
            vmem_limit_bytes=vmem_limit,
        ),
    )(patches, w, params)


def extract_patches_nchw(x, patch_size, *, dtype=None):
    """x: (B, C, H, W) -> (B*num_patches, C*p*p), matching Conv2d weight
    flatten order (C, kh, kw).  The optional dtype cast is fused by XLA into
    the same transpose pass (single HBM round trip, bf16 writeback)."""
    B, C, H, W = x.shape
    p = patch_size
    Hp, Wp = H // p, W // p
    # (B, C, Hp, p, Wp, p) -> (B, Hp, Wp, C, p, p)
    xp = x.reshape(B, C, Hp, p, Wp, p).transpose(0, 2, 4, 1, 3, 5)
    patches = xp.reshape(B * Hp * Wp, C * p * p)
    if dtype is not None and patches.dtype != dtype:
        patches = patches.astype(dtype)
    return patches, (Hp, Wp)


def wrapper2d_pretrain_forward(x, params, patch_size, *,
                               compute_dtype=jnp.bfloat16, tile_m=4096):
    """Forward pass of wrapper2D_pretrain (output_raw=True, train_embedder=True).

    x: (B, C, H, W) float32 (NCHW, PyTorch layout)
    returns: (B, num_patches, embed_dim)   [= Embeddings2D(x)[0]]

    compute_dtype controls the streaming precision of patches/weight into the
    MXU (accumulation is always f32; LayerNorm is always f32).  Pass
    jnp.float32 for bit-exact parity with the PyTorch f32 reference.
    """
    B = x.shape[0]
    patches, (Hp, Wp) = extract_patches_nchw(x, patch_size, dtype=compute_dtype)
    w = params["w"].astype(compute_dtype)
    out_flat = patch_embed_layernorm(
        patches, w, params["b"], params["gamma"], params["beta"], tile_m=tile_m
    )
    return out_flat.reshape(B, Hp * Wp, -1)


if __name__ == "__main__":
    # Small, shape-consistent synthetic config (scaled down from Swin-base:
    # embed_dim 128 -> 32, img_size 224 -> 16, in_channels from input_shape).
    B, C, H, W = 2, 4, 16, 16
    patch_size = 4
    embed_dim = 32
    num_patches = (H // patch_size) * (W // patch_size)

    key = jax.random.PRNGKey(0)
    kx, kw, kb, kg, kbe = jax.random.split(key, 5)

    x = jax.random.normal(kx, (B, C, H, W), dtype=jnp.float32)

    # Conv2d(C, embed_dim, kernel_size=patch, stride=patch) weight, reshaped
    # to a (C*p*p, embed_dim) matmul weight with (C, kh, kw) flatten order.
    conv_w = 0.05 * jax.random.normal(
        kw, (embed_dim, C, patch_size, patch_size), dtype=jnp.float32
    )
    w_mat = conv_w.reshape(embed_dim, C * patch_size * patch_size).T
    b = 0.01 * jax.random.normal(kb, (embed_dim,), dtype=jnp.float32)
    gamma = 1.0 + 0.01 * jax.random.normal(kg, (embed_dim,), dtype=jnp.float32)
    beta = 0.01 * jax.random.normal(kbe, (embed_dim,), dtype=jnp.float32)

    params = {"w": w_mat, "b": b, "gamma": gamma, "beta": beta}

    out = wrapper2d_pretrain_forward(x, params, patch_size)
    out = jax.block_until_ready(out)
    assert out.shape == (B, num_patches, embed_dim), out.shape

    # --- References ---------------------------------------------------------
    def ln_ref(y):
        mu = jnp.mean(y, axis=-1, keepdims=True)
        var = jnp.mean((y - mu) ** 2, axis=-1, keepdims=True)
        return (y - mu) / jnp.sqrt(var + LN_EPS) * gamma + beta

    patches_f32, _ = extract_patches_nchw(x, patch_size)

    # (1) Matched-precision reference (same bf16-rounded operands, f32 math):
    #     should agree to accumulation-order noise only.
    pm = patches_f32.astype(jnp.bfloat16).astype(jnp.float32)
    wm = w_mat.astype(jnp.bfloat16).astype(jnp.float32)
    ref_matched = ln_ref(pm @ wm + b).reshape(B, num_patches, embed_dim)
    assert jnp.allclose(out, ref_matched, atol=1e-3, rtol=1e-3)

    # (2) Full-f32 reference (PyTorch semantics): bf16 streaming introduces a
    #     small, bounded deviation.
    ref_f32 = ln_ref(patches_f32 @ w_mat + b).reshape(B, num_patches, embed_dim)
    assert jnp.allclose(out, ref_f32, atol=0.1, rtol=0.1)

    # (3) Exact f32 path (compute_dtype=f32) matches the f32 reference tightly.
    out_f32 = wrapper2d_pretrain_forward(x, params, patch_size,
                                         compute_dtype=jnp.float32)
    out_f32 = jax.block_until_ready(out_f32)
    assert jnp.allclose(out_f32, ref_f32, atol=1e-4, rtol=1e-4)

    print("KERNEL_OK")
</pallas_src>

<mosaic_0001>
module attributes {stable_mosaic.version = 11 : i64} {
  func.func @_patch_embed_ln_kernel(%arg0: i32, %arg1: memref<32x64xbf16, #tpu.memory_space<vmem>>, %arg2: memref<64x32xbf16, #tpu.memory_space<vmem>>, %arg3: memref<8x32xf32, #tpu.memory_space<vmem>>, %arg4: memref<32x32xf32, #tpu.memory_space<vmem>>) attributes {dimension_semantics = [#tpu.dimension_semantics<parallel>], iteration_bounds = array<i64: 1>, scalar_prefetch = 0 : i64, scratch_operands = 0 : i64, tpu.core_type = #tpu.core_type<tc>, window_params = [{transform_indices = @transform_0, window_bounds = array<i64: 32, 64>}, {pipeline_mode = #tpu.pipeline_mode<synchronous>, transform_indices = @transform_1, window_bounds = array<i64: 64, 32>}, {pipeline_mode = #tpu.pipeline_mode<synchronous>, transform_indices = @transform_2, window_bounds = array<i64: 8, 32>}, {transform_indices = @transform_3, window_bounds = array<i64: 32, 32>}]} {
    %c0 = arith.constant 0 : index
    %c0_0 = arith.constant 0 : index
    %0 = vector.load %arg1[%c0, %c0_0] : memref<32x64xbf16, #tpu.memory_space<vmem>>, vector<32x64xbf16>
    %c0_1 = arith.constant 0 : index
    %c0_2 = arith.constant 0 : index
    %1 = vector.load %arg2[%c0_1, %c0_2] : memref<64x32xbf16, #tpu.memory_space<vmem>>, vector<64x32xbf16>
    %cst = arith.constant dense<0.000000e+00> : vector<32x32xf32>
    %2 = tpu.matmul %0, %1, %cst {dimension_numbers = #tpu.dot_dimension_numbers<[1], [0], [0], [1], [0, 0, 1, 1], [], []>} : vector<32x64xbf16>, vector<64x32xbf16>, vector<32x32xf32> -> vector<32x32xf32>
    %c0_3 = arith.constant 0 : index
    %c0_4 = arith.constant 0 : index
    %3 = vector.load %arg3[%c0_3, %c0_4] : memref<8x32xf32, #tpu.memory_space<vmem>>, vector<8x32xf32>
    %4 = vector.extract_strided_slice %3 {offsets = [0, 0], sizes = [1, 32], strides = [1, 1]} : vector<8x32xf32> to vector<1x32xf32>
    %5 = vector.extract_strided_slice %3 {offsets = [1, 0], sizes = [1, 32], strides = [1, 1]} : vector<8x32xf32> to vector<1x32xf32>
    %6 = vector.extract_strided_slice %3 {offsets = [2, 0], sizes = [1, 32], strides = [1, 1]} : vector<8x32xf32> to vector<1x32xf32>
    %7 = vector.broadcast %4 : vector<1x32xf32> to vector<32x32xf32>
    %8 = arith.addf %2, %7 : vector<32x32xf32>
    %cst_5 = arith.constant dense<0.000000e+00> : vector<32xf32>
    %9 = vector.multi_reduction <add>, %8, %cst_5 [1] : vector<32x32xf32> to vector<32xf32>
    %10 = vector.shape_cast %9 : vector<32xf32> to vector<32x1xf32>
    %cst_6 = arith.constant 3.200000e+01 : f32
    %11 = vector.broadcast %cst_6 : f32 to vector<32x1xf32>
    %12 = arith.divf %10, %11 : vector<32x1xf32>
    %13 = vector.broadcast %12 : vector<32x1xf32> to vector<32x32xf32>
    %14 = arith.subf %8, %13 : vector<32x32xf32>
    %15 = arith.mulf %14, %14 : vector<32x32xf32>
    %cst_7 = arith.constant dense<0.000000e+00> : vector<32xf32>
    %16 = vector.multi_reduction <add>, %15, %cst_7 [1] : vector<32x32xf32> to vector<32xf32>
    %17 = vector.shape_cast %16 : vector<32xf32> to vector<32x1xf32>
    %cst_8 = arith.constant 3.200000e+01 : f32
    %18 = vector.broadcast %cst_8 : f32 to vector<32x1xf32>
    %19 = arith.divf %17, %18 : vector<32x1xf32>
    %cst_9 = arith.constant 9.99999974E-6 : f32
    %20 = vector.broadcast %cst_9 : f32 to vector<32x1xf32>
    %21 = arith.addf %19, %20 : vector<32x1xf32>
    %22 = math.rsqrt %21 : vector<32x1xf32>
    %23 = vector.broadcast %22 : vector<32x1xf32> to vector<32x32xf32>
    %24 = arith.mulf %14, %23 : vector<32x32xf32>
    %25 = vector.broadcast %5 : vector<1x32xf32> to vector<32x32xf32>
    %26 = arith.mulf %24, %25 : vector<32x32xf32>
    %27 = vector.broadcast %6 : vector<1x32xf32> to vector<32x32xf32>
    %28 = arith.addf %26, %27 : vector<32x32xf32>
    %c0_10 = arith.constant 0 : index
    %c0_11 = arith.constant 0 : index
    %29 = vector.load %arg4[%c0_10, %c0_11] : memref<32x32xf32, #tpu.memory_space<vmem>>, vector<32x32xf32>
    tpu.vector_store %arg4[%c0_10, %c0_11], %28 {strides = array<i32>} : memref<32x32xf32, #tpu.memory_space<vmem>>, vector<32x32xf32>,
    return
  }
  func.func @transform_0(%arg0: i32) -> (i32, i32) {
    %c0_i32 = arith.constant 0 : i32
    %c0_i32_0 = arith.constant 0 : i32
    return %arg0, %c0_i32 : i32, i32
  }
  func.func @transform_1(%arg0: i32) -> (i32, i32) {
    %c0_i32 = arith.constant 0 : i32
    %c0_i32_0 = arith.constant 0 : i32
    %c0_i32_1 = arith.constant 0 : i32
    return %c0_i32, %c0_i32_0 : i32, i32
  }
  func.func @transform_2(%arg0: i32) -> (i32, i32) {
    %c0_i32 = arith.constant 0 : i32
    %c0_i32_0 = arith.constant 0 : i32
    %c0_i32_1 = arith.constant 0 : i32
    return %c0_i32, %c0_i32_0 : i32, i32
  }
  func.func @transform_3(%arg0: i32) -> (i32, i32) {
    %c0_i32 = arith.constant 0 : i32
    %c0_i32_0 = arith.constant 0 : i32
    return %arg0, %c0_i32 : i32, i32
  }
}

</mosaic_0001>

<llo_original>
// kernel: tpu_custom_call.1
$region0: #{tpu_custom_call.1}
  #allocation0 [shape = 'u32[]', space=smem, size = 0x4, offset = 0x4, fixed_abs, tag = 'smem constant byte address 0x4 - core index']
  #allocation1 [shape = 'u32[144,128]{1,0:T(1,128)}', space=vmem, size = 0x12000, scoped, tag = 'internal scratch']
  %s0 = inlined_call_operand.vmem [shape: bf16[32,64], index: 0, kind: input, shape index: {}]
  %s1 = inlined_call_operand.vmem [shape: bf16[64,32], index: 1, kind: input, shape index: {}]
  %s2 = inlined_call_operand.vmem [shape: f32[8,32], index: 2, kind: input, shape index: {}]
  %s3 = inlined_call_operand.hbm [shape: f32[32,32], index: 3, kind: output, shape index: {}]
  %s4 = sld [smem:[#allocation0]]
  $region22: #{tpu_custom_call.1} parent=0
    _
  %s6 = ssub.s32 1, %s4
  %s7 = scalar_select 0, %s6, %s4
  $region1: #{tpu_custom_call.1} parent=0
    #allocation2 [shape = 'u8[16384]{0}', space=vmem, size = 0x4000, scoped, tag = 'output window, operand 0, single buffered']
    #allocation3 [shape = 's32[1]{0}', space=sflag, size = 0x4, scoped, tag = 'scoped memory for tpu_custom_call.1']
    %8 = vsyncpa [#allocation3], 0
    // Predicated region
    $region2: #{tpu_custom_call.1} parent=1 // pred_check
      _
    $region3: #{tpu_custom_call.1} parent=1 // pred_check_branch
      %10 = sbr.rel (0) target = $region5
    $region4: #{tpu_custom_call.1} parent=1 // pred_region
      _
    $region5: #{tpu_custom_call.1} parent=1 // pred_fallthru
      _
    // Predicated region
    $region6: #{tpu_custom_call.1} parent=1 // pred_check
      _
    $region7: #{tpu_custom_call.1} parent=1 // pred_check_branch
      %12 = sbr.rel (0) target = $region9
    $region8: #{tpu_custom_call.1} parent=1 // pred_region
      _
    $region9: #{tpu_custom_call.1} parent=1 // pred_fallthru
      _
    // Predicated region
    $region10: #{tpu_custom_call.1} parent=1 // pred_check
      _
    $region11: #{tpu_custom_call.1} parent=1 // pred_check_branch
      %14 = sbr.rel (0) target = $region13
    $region12: #{tpu_custom_call.1} parent=1 // pred_region
      _
    $region13: #{tpu_custom_call.1} parent=1 // pred_fallthru
      _
    %v16 = vld [vmem:[%s0] sm:$0xf]
    %v17 = vld [vmem:[%s0 + $0x4] sm:$0xf]
    %v18 = vld [vmem:[%s0 + $0x8] sm:$0xf]
    %v19 = vld [vmem:[%s0 + $0xc] sm:$0xf]
    %v20 = vld [vmem:[%s1] sm:$0xf]
    %v21 = vld [vmem:[%s1 + $0x4] sm:$0xf]
    %v22 = vld [vmem:[%s1 + $0x8] sm:$0xf]
    %v23 = vld [vmem:[%s1 + $0xc] sm:$0xf]
    %v24 = vld [vmem:[%s1 + $0x10] sm:$0xf]
    %v25 = vld [vmem:[%s1 + $0x14] sm:$0xf]
    %v26 = vld [vmem:[%s1 + $0x18] sm:$0xf]
    %v27 = vld [vmem:[%s1 + $0x1c] sm:$0xf]
    %v28 = vld [vmem:[%s2] sm:$0xff]
    %v29 = vlaneseq
    %v30 = vshrl.u32 %v29, 7
    %v31 = vsub.s32 0, %v30
    %v32 = vrot.slane %v28, %v31
    %v37 = vunpack.c.l.b16 %v16
    %v38 = vunpack.c.l.b16 %v17
    %v39 = vunpack.c.l.b16 %v18
    %v40 = vunpack.c.l.b16 %v19
    %v41 = vpack.c.b16 %v38, %v37
    %v42 = vpack.c.b16 %v40, %v39
    %v51 = vunpack.c.l.b16 %v20
    %v52 = vunpack.c.l.b16 %v21
    %v53 = vunpack.c.l.b16 %v22
    %v54 = vunpack.c.l.b16 %v23
    %v55 = vunpack.c.l.b16 %v24
    %v56 = vunpack.c.l.b16 %v25
    %v57 = vunpack.c.l.b16 %v26
    %v58 = vunpack.c.l.b16 %v27
    %v59 = vpack.c.b16 %v52, %v51
    %v60 = vpack.c.b16 %v54, %v53
    %v61 = vpack.c.b16 %v56, %v55
    %v62 = vpack.c.b16 %v58, %v57
    %vm67 = vcmask 523264
    %v69 = vsel %vm67, %v41, 0
    %v72 = vsel %vm67, %v42, 0
    %74 = vmatprep.subr.bf16.mxu0 0
    %75 = vmatpush1.bf16.msra.mxu0 %v59
    %76 = vmatprep.subr.bf16.mxu0 0
    %77 = vmatpush1.bf16.msra.mxu0 %v60
    %78 = vmatprep.subr.bf16.mxu0 0
    %79 = vmatpush1.bf16.msra.mxu0 %v61
    %80 = vmatprep.subr.bf16.mxu0 0
    %81 = vmatpush1.bf16.msra.mxu0 %v62
    %82 = vmatprep.subr.bf16.mxu0 0
    %83 = vmatpush1.bf16.msra.mxu0 0
    %84 = vmatprep.subr.bf16.mxu0 0
    %85 = vmatpush1.bf16.msra.mxu0 0
    %86 = vmatprep.subr.bf16.mxu0 0
    %87 = vmatpush1.bf16.msra.mxu0 0
    %88 = vmatprep.subr.bf16.mxu0 0
    %89 = vmatpush1.bf16.msra.mxu0 0
    %90 = vmatprep.subr.bf16.mxu0 0
    %91 = vmatpush1.bf16.msra.mxu0 0
    %92 = vmatprep.subr.bf16.mxu0 0
    %93 = vmatpush1.bf16.msra.mxu0 0
    %94 = vmatprep.subr.bf16.mxu0 0
    %95 = vmatpush1.bf16.msra.mxu0 0
    %96 = vmatprep.subr.bf16.mxu0 0
    %97 = vmatpush1.bf16.msra.mxu0 0
    %98 = vmatprep.subr.bf16.mxu0 0
    %99 = vmatpush1.bf16.msra.mxu0 0
    %100 = vmatprep.subr.bf16.mxu0 0
    %101 = vmatpush1.bf16.msra.mxu0 0
    %102 = vmatprep.subr.bf16.mxu0 0
    %103 = vmatpush1.bf16.msra.mxu0 0
    %104 = vmatprep.subr.bf16.mxu0 0
    %105 = vmatpush1.bf16.msra.mxu0 0
    %106 = vmatprep.mubr.bf16.mxu0 0
    %107 = vmatmul.mubr.bf16.gmra.mrb[0].mxu0 %v69
    %v108 = vpop.f32.mrb[0].mxu0
    %v109 = vadd.f32 %v32, %v108
    %v110 = vpop.f32.mrb[0].mxu0
    %v111 = vpop.f32.mrb[0].mxu0
    %v112 = vadd.f32 %v32, %v111
    %v113 = vpop.f32.mrb[0].mxu0
    %114 = vmatprep.mubr.bf16.mxu0 0
    %115 = vmatmul.mubr.bf16.gmra.mrb[0].mxu0 %v72
    %v116 = vpop.f32.mrb[0].mxu0
    %v117 = vadd.f32 %v32, %v116
    %v118 = vpop.f32.mrb[0].mxu0
    %v119 = vpop.f32.mrb[0].mxu0
    %v120 = vadd.f32 %v32, %v119
    %v121 = vpop.f32.mrb[0].mxu0
    %122 = vdwg.mxu0
    %vm123 = vcmask 261120
    %v124 = vsel %vm123, %v109, 0.0
    %125 = vadd.xlane.f32.xlu0 %v124
    %v126 = vpop.xlane.xlu0 %125
    %v127 = vsel %vm123, %v112, 0.0
    %128 = vadd.xlane.f32.xlu0 %v127
    %v129 = vpop.xlane.xlu0 %128
    %v130 = vsel %vm123, %v117, 0.0
    %131 = vadd.xlane.f32.xlu0 %v130
    %v132 = vpop.xlane.xlu0 %131
    %v133 = vsel %vm123, %v120, 0.0
    %134 = vadd.xlane.f32.xlu0 %v133
    %v135 = vpop.xlane.xlu0 %134
    %v136 = vrcp.pop 32.0
    %v137 = vmul.f32 %v126, %v136
    %v138 = vmul.f32 %v129, %v136
    %v139 = vmul.f32 %v132, %v136
    %v140 = vmul.f32 %v135, %v136
    %v141 = vsub.f32 %v109, %v137
    %v142 = vsub.f32 %v112, %v138
    %v143 = vsub.f32 %v117, %v139
    %v144 = vsub.f32 %v120, %v140
    %v145 = vmul.f32 %v141, %v141
    %v146 = vmul.f32 %v142, %v142
    %v147 = vmul.f32 %v143, %v143
    %v148 = vmul.f32 %v144, %v144
    %v149 = vsel %vm123, %v145, 0.0
    %150 = vadd.xlane.f32.xlu0 %v149
    %v151 = vpop.xlane.xlu0 %150
    %v152 = vsel %vm123, %v146, 0.0
    %153 = vadd.xlane.f32.xlu0 %v152
    %v154 = vpop.xlane.xlu0 %153
    %v155 = vsel %vm123, %v147, 0.0
    %156 = vadd.xlane.f32.xlu0 %v155
    %v157 = vpop.xlane.xlu0 %156
    %v158 = vsel %vm123, %v148, 0.0
    %159 = vadd.xlane.f32.xlu0 %v158
    %v160 = vpop.xlane.xlu0 %159
    %v161 = vmul.f32 %v151, %v136
    %v162 = vmul.f32 %v154, %v136
    %v163 = vmul.f32 %v157, %v136
    %v164 = vmul.f32 %v160, %v136
    %v165 = vadd.f32 %v161, 1e-05
    %v166 = vadd.f32 %v162, 1e-05
    %v167 = vadd.f32 %v163, 1e-05
    %v168 = vadd.f32 %v164, 1e-05
    %v169 = vrsqrt.pop %v165
    %v170 = vrsqrt.pop %v166
    %v171 = vrsqrt.pop %v167
    %v172 = vrsqrt.pop %v168
    %v173 = vmul.f32 %v141, %v169
    %v174 = vmul.f32 %v142, %v170
    %v175 = vmul.f32 %v143, %v171
    %v176 = vmul.f32 %v144, %v172
    %v177 = vlaneseq
    %v178 = vshrl.u32 %v177, 7
    %v179 = vsub.s32 1, %v178
    %v180 = vrot.slane %v28, %v179
    %v181 = vmul.f32 %v173, %v180
    %v182 = vmul.f32 %v174, %v180
    %v183 = vmul.f32 %v175, %v180
    %v184 = vmul.f32 %v176, %v180
    %v185 = vlaneseq
    %v186 = vshrl.u32 %v185, 7
    %v187 = vsub.s32 2, %v186
    %v188 = vrot.slane %v28, %v187
    %v189 = vadd.f32 %v181, %v188
    %v190 = vadd.f32 %v182, %v188
    %v191 = vadd.f32 %v183, %v188
    %v192 = vadd.f32 %v184, %v188
    %193 = vst.msk [vmem:[#allocation2] sm:$0xff] %vm123, %v189
    %194 = vst.msk [vmem:[#allocation2 + $0x8] sm:$0xff] %vm123, %v190
    %195 = vst.msk [vmem:[#allocation2 + $0x10] sm:$0xff] %vm123, %v191
    %196 = vst.msk [vmem:[#allocation2 + $0x18] sm:$0xff] %vm123, %v192
    // Predicated region
    $region14: #{tpu_custom_call.1} parent=1 // pred_check
      _
    $region15: #{tpu_custom_call.1} parent=1 // pred_check_branch
      %198 = sbr.rel (0) target = $region17
    $region16: #{tpu_custom_call.1} parent=1 // pred_region
      %s200 = ssub.s32 512, 512
      %201 = vsyncadd [#allocation3], %s200
      %s202 = sshll.u32 [#allocation2], 4
      %s203 = int_to_ptr.vmem [resolvable:$true] %s202
      %208 = dma.vmem_to_hbm [thread:$0]  %s203, 512, %s3, [#allocation3], 128, 128, 8
    $region17: #{tpu_custom_call.1} parent=1 // pred_fallthru
      _
    // Predicated region
    $region18: #{tpu_custom_call.1} parent=1 // pred_check
      _
    $region19: #{tpu_custom_call.1} parent=1 // pred_check_branch
      %210 = sbr.rel (0) target = $region21
    $region20: #{tpu_custom_call.1} parent=1 // pred_region
      %211 = dma.done [#allocation3], 512
    $region21: #{tpu_custom_call.1} parent=1 // pred_fallthru
      _
    %212 = vsyncpa [#allocation3], 1

</llo_original>
